<compile_context>
chip_gen: v6e
topology: v6e:2x2x1
jax: 0.10.0
libtpu: 0.0.40
codegen_flags: <defaults>
</compile_context>

<pallas_src>
import jax
import jax.numpy as jnp
from jax.experimental import pallas as pl
from jax.experimental.pallas import tpu as pltpu


_VMEM = pl.BlockSpec(memory_space=pltpu.MemorySpace.VMEM)

_SQRT_HALF = 0.7071067811865476


# ---------------------------------------------------------------------------
# Fused kernel: block-diag 1x1 conv (MXU) -> exact GELU (VPU/EUP) ->
# tap-fused 3x3 conv (single MXU matmul) + precomputed bias map.
# ---------------------------------------------------------------------------
def fused_conv_gelu_conv_kernel(cols_ref, w1bd_ref, b1r_ref, w2f_ref,
                                bmap_ref, o_ref):
    # cols_ref: (27, Pp)  im2col of the raw padded input, row = t*3 + c_in
    # w1bd_ref: (54, 27)  block-diagonal kron(I9, W1)      row = t*6 + c_mid
    # b1r_ref:  (54, 1)   conv1 bias tiled over the 9 taps
    # w2f_ref:  (39, 54)  tap-fused conv2 weight, col = t*6 + c_mid
    # bmap_ref: (39, Pp)  per-pixel bias map (b2 minus padded-tap correction)
    # o_ref:    (39, Pp)  lane-dense output
    pp = cols_ref.shape[-1]

    # 1x1 conv on all 9 taps at once: one MXU matmul.
    v1 = jnp.dot(w1bd_ref[...], cols_ref[...],
                 preferred_element_type=jnp.float32)
    v1 = v1 + jnp.broadcast_to(b1r_ref[...], (v1.shape[0], pp))

    # Exact GELU, the elementwise chain from the torch module:
    #   v2 = v1*0.5 ; v3 = v1*sqrt(1/2) ; v4 = erf(v3) ; v5 = v4+1 ; v6 = v2*v5
    v6 = (v1 * 0.5) * (jax.lax.erf(v1 * _SQRT_HALF) + 1.0)

    # 3x3 conv: single (39,54)@(54,Pp) MXU matmul, bias-map accumulator init.
    o_ref[...] = (jnp.dot(w2f_ref[...], v6, preferred_element_type=jnp.float32)
                  + bmap_ref[...])


# ---------------------------------------------------------------------------
# One-time weight re-layout (hoisted out of the forward pass).
# ---------------------------------------------------------------------------
def prepare_params(params):
    w1, b1, w2, b2 = params                     # torch layouts: OIHW
    cout1, cin = w1.shape[0], w1.shape[1]       # 6, 3
    cout2 = w2.shape[0]                         # 39

    w1m = w1[:, :, 0, 0]                                    # (6, 3)
    # Block-diagonal 1x1 weight: W1bd[t*6+o, t*3+i] = w1[o, i]
    w1bd = jnp.kron(jnp.eye(9, dtype=w1m.dtype), w1m)       # (54, 27)
    b1r = jnp.tile(b1, 9).reshape(9 * cout1, 1)             # (54, 1)

    # Tap-fused conv2 weight: W2f[o, t*6+c] = w2[o, c, kh, kw], t = kh*3+kw
    w2f = jnp.transpose(w2, (0, 2, 3, 1)).reshape(cout2, 9 * cout1)  # (39, 54)

    # Per-tap contribution that a zero-padded *input* tap wrongly produces:
    #   g[t, o] = sum_c w2[o, c, kh, kw] * GELU(b1)[c]
    gelu_b1 = (b1 * 0.5) * (jax.lax.erf(b1 * _SQRT_HALF) + 1.0)      # (6,)
    g = jnp.einsum('ockl,c->klo', w2, gelu_b1).reshape(9, cout2)     # (9, 39)

    return w1bd, b1r, w2f, g, b2


# ---------------------------------------------------------------------------
# Forward wrapper: layout plumbing (im2col, lane padding, pad-tap bias map).
# ---------------------------------------------------------------------------
def model_forward_impl(x, w1bd, b1r, w2f, g, b2):
    N, Cin, H, W = x.shape
    Cout2 = w2f.shape[0]
    KH = KW = 3
    stride = 2
    pad = 1
    Ho = (H + 2 * pad - KH) // stride + 1
    Wo = (W + 2 * pad - KW) // stride + 1
    P = N * Ho * Wo
    Pp = ((P + 127) // 128) * 128               # lane-dense padding

    # im2col of the raw input (tap-major, in-channel minor): (27, Pp).
    xp = jnp.pad(x, ((0, 0), (0, 0), (pad, pad), (pad, pad)))
    taps = []
    for kh in range(KH):
        for kw in range(KW):
            taps.append(xp[:, :, kh:kh + stride * Ho:stride,
                               kw:kw + stride * Wo:stride])   # (N, Cin, Ho, Wo)
    cols = jnp.stack(taps, axis=0)                  # (9, N, Cin, Ho, Wo)
    cols = jnp.transpose(cols, (0, 2, 1, 3, 4))     # (9, Cin, N, Ho, Wo)
    cols = cols.reshape(KH * KW * Cin, P)           # row = t*3 + c
    cols = jnp.pad(cols, ((0, 0), (0, Pp - P)))

    # Pad-tap mask (9, P): which taps of each output pixel fall in conv2's
    # zero-padding region.  Used to fold the padding correction into the bias.
    ys = jnp.arange(Ho)
    xs = jnp.arange(Wo)
    khs = jnp.arange(KH)
    kws = jnp.arange(KW)
    iy = stride * ys[None, :] + khs[:, None] - pad            # (3, Ho)
    ix = stride * xs[None, :] + kws[:, None] - pad            # (3, Wo)
    row_pad = (iy < 0) | (iy >= H)                            # (3, Ho)
    col_pad = (ix < 0) | (ix >= W)                            # (3, Wo)
    pm = (row_pad[:, None, :, None] | col_pad[None, :, None, :])  # (3,3,Ho,Wo)
    pm = pm.reshape(KH * KW, Ho * Wo).astype(jnp.float32)
    pm = jnp.tile(pm[:, None, :], (1, N, 1)).reshape(KH * KW, P)  # (9, P)

    # bias_map[o, p] = b2[o] - sum_t pm[t, p] * g[t, o]
    bmap = b2[:, None] - jnp.einsum('to,tp->op', g, pm)       # (39, P)
    bmap = jnp.pad(bmap, ((0, 0), (0, Pp - P)))

    out = pl.pallas_call(
        fused_conv_gelu_conv_kernel,
        out_shape=jax.ShapeDtypeStruct((Cout2, Pp), jnp.float32),
        in_specs=[_VMEM, _VMEM, _VMEM, _VMEM, _VMEM],
        out_specs=_VMEM,
    )(cols, w1bd, b1r, w2f, bmap)

    out = out[:, :P].reshape(Cout2, N, Ho, Wo)      # drop lane padding
    return jnp.transpose(out, (1, 0, 2, 3))         # (N, Cout2, Ho, Wo)


model_forward = jax.jit(model_forward_impl)


# ---------------------------------------------------------------------------
# Pure-JAX reference (for correctness check).
# ---------------------------------------------------------------------------
def reference_forward(x, params):
    w1, b1, w2, b2 = params
    v1 = jax.lax.conv_general_dilated(
        x, w1, window_strides=(1, 1), padding='VALID',
        dimension_numbers=('NCHW', 'OIHW', 'NCHW'),
        precision=jax.lax.Precision.HIGHEST) + b1.reshape(1, -1, 1, 1)
    v6 = (v1 * 0.5) * (jax.lax.erf(v1 * _SQRT_HALF) + 1.0)
    v7 = jax.lax.conv_general_dilated(
        v6, w2, window_strides=(2, 2), padding=((1, 1), (1, 1)),
        dimension_numbers=('NCHW', 'OIHW', 'NCHW'),
        precision=jax.lax.Precision.HIGHEST) + b2.reshape(1, -1, 1, 1)
    return v7


# ---------------------------------------------------------------------------
def init_params(key):
    k1, k2, k3, k4 = jax.random.split(key, 4)
    bound1 = 1.0 / (3 * 1 * 1) ** 0.5
    w1 = jax.random.uniform(k1, (6, 3, 1, 1), jnp.float32, -bound1, bound1)
    b1 = jax.random.uniform(k2, (6,), jnp.float32, -bound1, bound1)
    bound2 = 1.0 / (6 * 3 * 3) ** 0.5
    w2 = jax.random.uniform(k3, (39, 6, 3, 3), jnp.float32, -bound2, bound2)
    b2 = jax.random.uniform(k4, (39,), jnp.float32, -bound2, bound2)
    return (w1, b1, w2, b2)


if __name__ == "__main__":
    key = jax.random.PRNGKey(0)
    kx, kp = jax.random.split(key)
    x1 = jax.random.normal(kx, (1, 3, 35, 38), jnp.float32)   # NCHW like torch
    params = init_params(kp)

    prepped = prepare_params(params)            # weight re-layout, done once
    out = model_forward(x1, *prepped)
    out = jax.block_until_ready(out)

    assert out.shape == (1, 39, 18, 19), out.shape

    ref = jax.block_until_ready(reference_forward(x1, params))
    assert jnp.allclose(out, ref, rtol=1e-2, atol=1e-2), (
        float(jnp.max(jnp.abs(out - ref))))

    print("KERNEL_OK")
</pallas_src>

<mosaic_0001>
module attributes {stable_mosaic.version = 11 : i64} {
  func.func @fused_conv_gelu_conv_kernel(%arg0: memref<27x384xf32, #tpu.memory_space<vmem>>, %arg1: memref<54x27xf32, #tpu.memory_space<vmem>>, %arg2: memref<54x1xf32, #tpu.memory_space<vmem>>, %arg3: memref<39x54xf32, #tpu.memory_space<vmem>>, %arg4: memref<39x384xf32, #tpu.memory_space<vmem>>, %arg5: memref<39x384xf32, #tpu.memory_space<vmem>>) attributes {dimension_semantics = [], scalar_prefetch = 0 : i64, scratch_operands = 0 : i64, tpu.core_type = #tpu.core_type<tc>} {
    %c0 = arith.constant 0 : index
    %c0_0 = arith.constant 0 : index
    %0 = vector.load %arg1[%c0, %c0_0] : memref<54x27xf32, #tpu.memory_space<vmem>>, vector<54x27xf32>
    %c0_1 = arith.constant 0 : index
    %c0_2 = arith.constant 0 : index
    %1 = vector.load %arg0[%c0_1, %c0_2] : memref<27x384xf32, #tpu.memory_space<vmem>>, vector<27x384xf32>
    %cst = arith.constant dense<0.000000e+00> : vector<54x384xf32>
    %2 = tpu.matmul %0, %1, %cst {dimension_numbers = #tpu.dot_dimension_numbers<[1], [0], [0], [1], [0, 0, 1, 1], [], []>} : vector<54x27xf32>, vector<27x384xf32>, vector<54x384xf32> -> vector<54x384xf32>
    %c0_3 = arith.constant 0 : index
    %c0_4 = arith.constant 0 : index
    %3 = vector.load %arg2[%c0_3, %c0_4] : memref<54x1xf32, #tpu.memory_space<vmem>>, vector<54x1xf32>
    %4 = vector.shape_cast %3 : vector<54x1xf32> to vector<54x1xf32>
    %5 = vector.broadcast %4 : vector<54x1xf32> to vector<54x384xf32>
    %6 = arith.addf %2, %5 : vector<54x384xf32>
    %cst_5 = arith.constant 5.000000e-01 : f32
    %7 = vector.broadcast %cst_5 : f32 to vector<54x384xf32>
    %8 = arith.mulf %6, %7 : vector<54x384xf32>
    %cst_6 = arith.constant 0.707106769 : f32
    %9 = vector.broadcast %cst_6 : f32 to vector<54x384xf32>
    %10 = arith.mulf %6, %9 : vector<54x384xf32>
    %11 = math.erf %10 : vector<54x384xf32>
    %cst_7 = arith.constant 1.000000e+00 : f32
    %12 = vector.broadcast %cst_7 : f32 to vector<54x384xf32>
    %13 = arith.addf %11, %12 : vector<54x384xf32>
    %14 = arith.mulf %8, %13 : vector<54x384xf32>
    %c0_8 = arith.constant 0 : index
    %c0_9 = arith.constant 0 : index
    %15 = vector.load %arg3[%c0_8, %c0_9] : memref<39x54xf32, #tpu.memory_space<vmem>>, vector<39x54xf32>
    %cst_10 = arith.constant dense<0.000000e+00> : vector<39x384xf32>
    %16 = tpu.matmul %15, %14, %cst_10 {dimension_numbers = #tpu.dot_dimension_numbers<[1], [0], [0], [1], [0, 0, 1, 1], [], []>} : vector<39x54xf32>, vector<54x384xf32>, vector<39x384xf32> -> vector<39x384xf32>
    %c0_11 = arith.constant 0 : index
    %c0_12 = arith.constant 0 : index
    %17 = vector.load %arg4[%c0_11, %c0_12] : memref<39x384xf32, #tpu.memory_space<vmem>>, vector<39x384xf32>
    %18 = arith.addf %16, %17 : vector<39x384xf32>
    %c0_13 = arith.constant 0 : index
    %c0_14 = arith.constant 0 : index
    %19 = vector.load %arg5[%c0_13, %c0_14] : memref<39x384xf32, #tpu.memory_space<vmem>>, vector<39x384xf32>
    tpu.vector_store %arg5[%c0_13, %c0_14], %18 {strides = array<i32>} : memref<39x384xf32, #tpu.memory_space<vmem>>, vector<39x384xf32>,
    return
  }
}

</mosaic_0001>

<llo_original>
// kernel: model_forward_impl.1
$region0: #{model_forward_impl.1}
  #allocation0 [shape = 'u32[]', space=smem, size = 0x4, offset = 0x4, fixed_abs, tag = 'smem constant byte address 0x4 - core index']
  #allocation1 [shape = 'u32[144,128]{1,0:T(1,128)}', space=vmem, size = 0x12000, scoped, tag = 'internal scratch']
  %s0 = inlined_call_operand.vmem [shape: f32[27,384], index: 0, kind: input, shape index: {}]
  %s1 = inlined_call_operand.vmem [shape: f32[54,27], index: 1, kind: input, shape index: {}]
  %s2 = inlined_call_operand.vmem [shape: f32[54,1], index: 2, kind: input, shape index: {}]
  %s3 = inlined_call_operand.vmem [shape: f32[39,54], index: 3, kind: input, shape index: {}]
  %s4 = inlined_call_operand.vmem [shape: f32[39,384], index: 4, kind: input, shape index: {}]
  %s5 = inlined_call_operand.vmem [shape: f32[39,384], index: 5, kind: output, shape index: {}]
  %s6 = sld [smem:[#allocation0]]
  $region30: #{model_forward_impl.1} parent=0
    _
  %s8 = ssub.s32 1, %s6
  %s9 = scalar_select 0, %s8, %s6
  // Predicated region
  $region2: #{model_forward_impl.1} parent=0 // pred_check
    _
  $region3: #{model_forward_impl.1} parent=0 // pred_check_branch
    %11 = sbr.rel (0) target = $region5
  $region4: #{model_forward_impl.1} parent=0 // pred_region
    _
  $region5: #{model_forward_impl.1} parent=0 // pred_fallthru
    _
  // Predicated region
  $region6: #{model_forward_impl.1} parent=0 // pred_check
    _
  $region7: #{model_forward_impl.1} parent=0 // pred_check_branch
    %13 = sbr.rel (0) target = $region9
  $region8: #{model_forward_impl.1} parent=0 // pred_region
    _
  $region9: #{model_forward_impl.1} parent=0 // pred_fallthru
    _
  // Predicated region
  $region10: #{model_forward_impl.1} parent=0 // pred_check
    _
  $region11: #{model_forward_impl.1} parent=0 // pred_check_branch
    %15 = sbr.rel (0) target = $region13
  $region12: #{model_forward_impl.1} parent=0 // pred_region
    _
  $region13: #{model_forward_impl.1} parent=0 // pred_fallthru
    _
  // Predicated region
  $region14: #{model_forward_impl.1} parent=0 // pred_check
    _
  $region15: #{model_forward_impl.1} parent=0 // pred_check_branch
    %17 = sbr.rel (0) target = $region17
  $region16: #{model_forward_impl.1} parent=0 // pred_region
    _
  $region17: #{model_forward_impl.1} parent=0 // pred_fallthru
    _
  // Predicated region
  $region18: #{model_forward_impl.1} parent=0 // pred_check
    _
  $region19: #{model_forward_impl.1} parent=0 // pred_check_branch
    %19 = sbr.rel (0) target = $region21
  $region20: #{model_forward_impl.1} parent=0 // pred_region
    _
  $region21: #{model_forward_impl.1} parent=0 // pred_fallthru
    _
  %v20 = vld [vmem:[%s1] sm:$0xff]
  %v21 = vld [vmem:[%s1 + $0x8] sm:$0xff]
  %v22 = vld [vmem:[%s1 + $0x10] sm:$0xff]
  %v23 = vld [vmem:[%s1 + $0x18] sm:$0xff]
  %v24 = vld [vmem:[%s1 + $0x20] sm:$0xff]
  %v25 = vld [vmem:[%s1 + $0x28] sm:$0xff]
  %v26 = vld [vmem:[%s1 + $0x30] sm:$0x3f]
  %v27 = vld [vmem:[%s0] sm:$0xff]
  %v28 = vld [vmem:[%s0 + $0x8] sm:$0xff]
  %v29 = vld [vmem:[%s0 + $0x10] sm:$0xff]
  %v30 = vld [vmem:[%s0 + $0x18] sm:$0xff]
  %v31 = vld [vmem:[%s0 + $0x20] sm:$0xff]
  %v32 = vld [vmem:[%s0 + $0x28] sm:$0xff]
  %v33 = vld [vmem:[%s0 + $0x30] sm:$0xff]
  %v34 = vld [vmem:[%s0 + $0x38] sm:$0xff]
  %v35 = vld [vmem:[%s0 + $0x40] sm:$0xff]
  %v36 = vld [vmem:[%s0 + $0x48] sm:$0x7]
  %v37 = vld [vmem:[%s0 + $0x50] sm:$0x7]
  %v38 = vld [vmem:[%s0 + $0x58] sm:$0x7]
  %v39 = vld [vmem:[%s2] sm:$0xff]
  %v40 = vld [vmem:[%s2 + $0x8] sm:$0xff]
  %v41 = vld [vmem:[%s2 + $0x10] sm:$0xff]
  %v42 = vld [vmem:[%s2 + $0x18] sm:$0xff]
  %v43 = vld [vmem:[%s2 + $0x20] sm:$0xff]
  %v44 = vld [vmem:[%s2 + $0x28] sm:$0xff]
  %v45 = vld [vmem:[%s2 + $0x30] sm:$0x3f]
  %47 = vset.pattern.permute.xlu0 0
  %48 = vperm.xlu0 %47, %v39
  %v49 = vpop.permute.xlu0 %48
  %52 = vset.pattern.permute.xlu0 0
  %53 = vperm.xlu0 %52, %v40
  %v54 = vpop.permute.xlu0 %53
  %57 = vset.pattern.permute.xlu0 0
  %58 = vperm.xlu0 %57, %v41
  %v59 = vpop.permute.xlu0 %58
  %62 = vset.pattern.permute.xlu0 0
  %63 = vperm.xlu0 %62, %v42
  %v64 = vpop.permute.xlu0 %63
  %67 = vset.pattern.permute.xlu0 0
  %68 = vperm.xlu0 %67, %v43
  %v69 = vpop.permute.xlu0 %68
  %72 = vset.pattern.permute.xlu0 0
  %73 = vperm.xlu0 %72, %v44
  %v74 = vpop.permute.xlu0 %73
  %77 = vset.pattern.permute.xlu0 0
  %78 = vperm.xlu0 %77, %v45
  %v79 = vpop.permute.xlu0 %78
  %vm81 = vcmask 220160
  %v83 = vsel %vm81, %v20, 0
  %v86 = vsel %vm81, %v21, 0
  %v89 = vsel %vm81, %v22, 0
  %v92 = vsel %vm81, %v23, 0
  %v95 = vsel %vm81, %v24, 0
  %v98 = vsel %vm81, %v25, 0
  %v101 = vsel %vm81, %v26, 0
  %vm103 = vcmask 1042432
  %v105 = vsel %vm103, %v36, 0
  %v108 = vsel %vm103, %v37, 0
  %v111 = vsel %vm103, %v38, 0
  %113 = vmatprep.subr.mxu0 0.0
  %114 = vmatpush1.msra.mxu0 0.0
  %115 = vmatprep.subr.mxu0 0.0
  %116 = vmatpush1.msra.mxu0 0.0
  %117 = vmatprep.subr.mxu0 0.0
  %118 = vmatpush1.msra.mxu0 0.0
  %119 = vmatprep.subr.mxu0 0.0
  %120 = vmatpush1.msra.mxu0 0.0
  %121 = vmatprep.subr.mxu0 0.0
  %122 = vmatpush1.msra.mxu0 0.0
  %123 = vmatprep.subr.mxu0 0.0
  %124 = vmatpush1.msra.mxu0 0.0
  %125 = vmatprep.subr.mxu0 0.0
  %126 = vmatpush1.msra.mxu0 0.0
  %127 = vmatprep.subr.mxu0 0.0
  %128 = vmatpush1.msra.mxu0 0.0
  %129 = vmatprep.subr.mxu0 0.0
  %130 = vmatpush1.msra.mxu0 0.0
  %131 = vmatprep.subr.mxu0 0.0
  %132 = vmatpush1.msra.mxu0 0.0
  %133 = vmatprep.subr.mxu0 0.0
  %134 = vmatpush1.msra.mxu0 0.0
  %135 = vmatprep.subr.mxu0 0.0
  %136 = vmatpush1.msra.mxu0 0.0
  %137 = vmatprep.subr.mxu0 %v108
  %138 = vmatpush1.msra.mxu0 %v105
  %139 = vmatprep.subr.mxu0 %v34
  %140 = vmatpush1.msra.mxu0 %v33
  %141 = vmatprep.subr.mxu0 %v31
  %142 = vmatpush1.msra.mxu0 %v30
  %143 = vmatprep.subr.mxu0 %v28
  %144 = vmatpush1.msra.mxu0 %v27
  %145 = vmatprep.subr.mxu0 0.0
  %146 = vmatpush2.msra.mxu0 0.0
  %147 = vmatprep.subr.mxu0 0.0
  %148 = vmatpush2.msra.mxu0 0.0
  %149 = vmatprep.subr.mxu0 0.0
  %150 = vmatpush2.msra.mxu0 0.0
  %151 = vmatprep.subr.mxu0 0.0
  %152 = vmatpush2.msra.mxu0 0.0
  %153 = vmatprep.subr.mxu0 0.0
  %154 = vmatpush2.msra.mxu0 0.0
  %155 = vmatprep.subr.mxu0 0.0
  %156 = vmatpush2.msra.mxu0 0.0
  %157 = vmatprep.subr.mxu0 0.0
  %158 = vmatpush2.msra.mxu0 0.0
  %159 = vmatprep.subr.mxu0 0.0
  %160 = vmatpush2.msra.mxu0 0.0
  %161 = vmatprep.subr.mxu0 0.0
  %162 = vmatpush2.msra.mxu0 0.0
  %163 = vmatprep.subr.mxu0 0.0
  %164 = vmatpush2.msra.mxu0 0.0
  %165 = vmatprep.subr.mxu0 0.0
  %166 = vmatpush2.msra.mxu0 0.0
  %167 = vmatprep.subr.mxu0 0.0
  %168 = vmatpush2.msra.mxu0 0.0
  %169 = vmatprep.subr.mxu0 0.0
  %170 = vmatpush2.msra.mxu0 0.0
  %171 = vmatprep.subr.mxu0 0.0
  %172 = vmatpush2.msra.mxu0 0.0
  %173 = vmatprep.subr.mxu0 0.0
  %174 = vmatpush2.msra.mxu0 0.0
  %175 = vmatprep.subr.mxu0 0.0
  %176 = vmatpush2.msra.mxu0 0.0
  %177 = vmatprep.mubr.f32.mxu0 0.0
  %178 = vmatmul.mubr.f32.gmra.mxu0 %v83
  %v179 = vpop.f32.mrf.mxu0
  %v180 = vadd.f32 %v49, %v179
  %v181 = vpop.f32.mrf.mxu0
  %v182 = vadd.f32 %v49, %v181
  %183 = vmatprep.mubr.f32.mxu0 0.0
  %184 = vmatmul.mubr.f32.gmra.mxu0 %v86
  %v185 = vpop.f32.mrf.mxu0
  %v186 = vadd.f32 %v54, %v185
  %v187 = vpop.f32.mrf.mxu0
  %v188 = vadd.f32 %v54, %v187
  %189 = vmatprep.mubr.f32.mxu0 0.0
  %190 = vmatmul.mubr.f32.gmra.mxu0 %v89
  %v191 = vpop.f32.mrf.mxu0
  %v192 = vadd.f32 %v59, %v191
  %v193 = vpop.f32.mrf.mxu0
  %v194 = vadd.f32 %v59, %v193
  %195 = vmatprep.mubr.f32.mxu0 0.0
  %196 = vmatmul.mubr.f32.gmra.mxu0 %v92
  %v197 = vpop.f32.mrf.mxu0
  %v198 = vadd.f32 %v64, %v197
  %v199 = vpop.f32.mrf.mxu0
  %v200 = vadd.f32 %v64, %v199
  %201 = vmatprep.mubr.f32.mxu0 0.0
  %202 = vmatmul.mubr.f32.gmra.mxu0 %v95
  %v203 = vpop.f32.mrf.mxu0
  %v204 = vadd.f32 %v69, %v203
  %v205 = vpop.f32.mrf.mxu0
  %v206 = vadd.f32 %v69, %v205
  %207 = vmatprep.mubr.f32.mxu0 0.0
  %208 = vmatmul.mubr.f32.gmra.mxu0 %v98
  %v209 = vpop.f32.mrf.mxu0
  %v210 = vadd.f32 %v74, %v209
  %v211 = vpop.f32.mrf.mxu0
  %v212 = vadd.f32 %v74, %v211
  %213 = vmatprep.mubr.f32.mxu0 0.0
  %214 = vmatmul.mubr.f32.gmra.mxu0 %v101
  %v215 = vpop.f32.mrf.mxu0
  %v216 = vadd.f32 %v79, %v215
  %v217 = vpop.f32.mrf.mxu0
  %v218 = vadd.f32 %v79, %v217
  %219 = vdwg.mxu0
  %220 = vmatprep.subr.mxu0 0.0
  %221 = vmatpush1.msra.mxu0 0.0
  %222 = vmatprep.subr.mxu0 0.0
  %223 = vmatpush1.msra.mxu0 0.0
  %224 = vmatprep.subr.mxu0 0.0
  %225 = vmatpush1.msra.mxu0 0.0
  %226 = vmatprep.subr.mxu0 0.0
  %227 = vmatpush1.msra.mxu0 0.0
  %228 = vmatprep.subr.mxu0 0.0
  %229 = vmatpush1.msra.mxu0 0.0
  %230 = vmatprep.subr.mxu0 0.0
  %231 = vmatpush1.msra.mxu0 0.0
  %232 = vmatprep.subr.mxu0 0.0
  %233 = vmatpush1.msra.mxu0 0.0
  %234 = vmatprep.subr.mxu0 0.0
  %235 = vmatpush1.msra.mxu0 0.0
  %236 = vmatprep.subr.mxu0 0.0
  %237 = vmatpush1.msra.mxu0 0.0
  %238 = vmatprep.subr.mxu0 0.0
  %239 = vmatpush1.msra.mxu0 0.0
  %240 = vmatprep.subr.mxu0 0.0
  %241 = vmatpush1.msra.mxu0 0.0
  %242 = vmatprep.subr.mxu0 0.0
  %243 = vmatpush1.msra.mxu0 0.0
  %244 = vmatprep.subr.mxu0 0.0
  %245 = vmatpush1.msra.mxu0 %v111
  %246 = vmatprep.subr.mxu0 0.0
  %247 = vmatpush1.msra.mxu0 %v35
  %248 = vmatprep.subr.mxu0 0.0
  %249 = vmatpush1.msra.mxu0 %v32
  %250 = vmatprep.subr.mxu0 0.0
  %251 = vmatpush1.msra.mxu0 %v29
  %252 = vmatprep.subr.mxu0 0.0
  %253 = vmatpush2.msra.mxu0 0.0
  %254 = vmatprep.subr.mxu0 0.0
  %255 = vmatpush2.msra.mxu0 0.0
  %256 = vmatprep.subr.mxu0 0.0
  %257 = vmatpush2.msra.mxu0 0.0
  %258 = vmatprep.subr.mxu0 0.0
  %259 = vmatpush2.msra.mxu0 0.0
  %260 = vmatprep.subr.mxu0 0.0
  %261 = vmatpush2.msra.mxu0 0.0
  %262 = vmatprep.subr.mxu0 0.0
  %263 = vmatpush2.msra.mxu0 0.0
  %264 = vmatprep.subr.mxu0 0.0
  %265 = vmatpush2.msra.mxu0 0.0
  %266 = vmatprep.subr.mxu0 0.0
  %267 = vmatpush2.msra.mxu0 0.0
  %268 = vmatprep.subr.mxu0 0.0
  %269 = vmatpush2.msra.mxu0 0.0
  %270 = vmatprep.subr.mxu0 0.0
  %271 = vmatpush2.msra.mxu0 0.0
  %272 = vmatprep.subr.mxu0 0.0
  %273 = vmatpush2.msra.mxu0 0.0
  %274 = vmatprep.subr.mxu0 0.0
  %275 = vmatpush2.msra.mxu0 0.0
  %276 = vmatprep.subr.mxu0 0.0
  %277 = vmatpush2.msra.mxu0 0.0
  %278 = vmatprep.subr.mxu0 0.0
  %279 = vmatpush2.msra.mxu0 0.0
  %280 = vmatprep.subr.mxu0 0.0
  %281 = vmatpush2.msra.mxu0 0.0
  %282 = vmatprep.subr.mxu0 0.0
  %283 = vmatpush2.msra.mxu0 0.0
  %284 = vmatprep.mubr.f32.mxu0 0.0
  %285 = vmatmul.mubr.f32.gmra.mxu0 %v83
  %v286 = vpop.f32.mrf.mxu0
  %v287 = vadd.f32 %v49, %v286
  %v288 = vpop.f32.mrf.mxu0
  %289 = vmatprep.mubr.f32.mxu0 0.0
  %290 = vmatmul.mubr.f32.gmra.mxu0 %v86
  %v291 = vpop.f32.mrf.mxu0
  %v292 = vadd.f32 %v54, %v291
  %v293 = vpop.f32.mrf.mxu0
  %294 = vmatprep.mubr.f32.mxu0 0.0
  %295 = vmatmul.mubr.f32.gmra.mxu0 %v89
  %v296 = vpop.f32.mrf.mxu0
  %v297 = vadd.f32 %v59, %v296
  %v298 = vpop.f32.mrf.mxu0
  %299 = vmatprep.mubr.f32.mxu0 0.0
  %300 = vmatmul.mubr.f32.gmra.mxu0 %v92
  %v301 = vpop.f32.mrf.mxu0
  %v302 = vadd.f32 %v64, %v301
  %v303 = vpop.f32.mrf.mxu0
  %304 = vmatprep.mubr.f32.mxu0 0.0
  %305 = vmatmul.mubr.f32.gmra.mxu0 %v95
  %v306 = vpop.f32.mrf.mxu0
  %v307 = vadd.f32 %v69, %v306
  %v308 = vpop.f32.mrf.mxu0
  %309 = vmatprep.mubr.f32.mxu0 0.0
  %310 = vmatmul.mubr.f32.gmra.mxu0 %v98
  %v311 = vpop.f32.mrf.mxu0
  %v312 = vadd.f32 %v74, %v311
  %v313 = vpop.f32.mrf.mxu0
  %314 = vmatprep.mubr.f32.mxu0 0.0
  %315 = vmatmul.mubr.f32.gmra.mxu0 %v101
  %v316 = vpop.f32.mrf.mxu0
  %v317 = vadd.f32 %v79, %v316
  %v318 = vpop.f32.mrf.mxu0
  %319 = vdwg.mxu0
  %v320 = vmul.f32 %v180, 0.5
  %v321 = vmul.f32 %v182, 0.5
  %v322 = vmul.f32 %v287, 0.5
  %v323 = vmul.f32 %v186, 0.5
  %v324 = vmul.f32 %v188, 0.5
  %v325 = vmul.f32 %v292, 0.5
  %v326 = vmul.f32 %v192, 0.5
  %v327 = vmul.f32 %v194, 0.5
  %v328 = vmul.f32 %v297, 0.5
  %v329 = vmul.f32 %v198, 0.5
  %v330 = vmul.f32 %v200, 0.5
  %v331 = vmul.f32 %v302, 0.5
  %v332 = vmul.f32 %v204, 0.5
  %v333 = vmul.f32 %v206, 0.5
  %v334 = vmul.f32 %v307, 0.5
  %v335 = vmul.f32 %v210, 0.5
  %v336 = vmul.f32 %v212, 0.5
  %v337 = vmul.f32 %v312, 0.5
  %v338 = vmul.f32 %v216, 0.5
  %v339 = vmul.f32 %v218, 0.5
  %v340 = vmul.f32 %v317, 0.5
  %v341 = vmul.f32 %v180, 0.70710677
  %v342 = vmul.f32 %v182, 0.70710677
  %v343 = vmul.f32 %v287, 0.70710677
  %v344 = vmul.f32 %v186, 0.70710677
  %v345 = vmul.f32 %v188, 0.70710677
  %v346 = vmul.f32 %v292, 0.70710677
  %v347 = vmul.f32 %v192, 0.70710677
  %v348 = vmul.f32 %v194, 0.70710677
  %v349 = vmul.f32 %v297, 0.70710677
  %v350 = vmul.f32 %v198, 0.70710677
  %v351 = vmul.f32 %v200, 0.70710677
  %v352 = vmul.f32 %v302, 0.70710677
  %v353 = vmul.f32 %v204, 0.70710677
  %v354 = vmul.f32 %v206, 0.70710677
  %v355 = vmul.f32 %v307, 0.70710677
  %v356 = vmul.f32 %v210, 0.70710677
  %v357 = vmul.f32 %v212, 0.70710677
  %v358 = vmul.f32 %v312, 0.70710677
  %v359 = vmul.f32 %v216, 0.70710677
  %v360 = vmul.f32 %v218, 0.70710677
  %v361 = vmul.f32 %v317, 0.70710677
  %v362 = verf.f32.pop %v341
  %v363 = verf.f32.pop %v342
  %v364 = verf.f32.pop %v343
  %v365 = verf.f32.pop %v344
  %v366 = verf.f32.pop %v345
  %v367 = verf.f32.pop %v346
  %v368 = verf.f32.pop %v347
  %v369 = verf.f32.pop %v348
  %v370 = verf.f32.pop %v349
  %v371 = verf.f32.pop %v350
  %v372 = verf.f32.pop %v351
  %v373 = verf.f32.pop %v352
  %v374 = verf.f32.pop %v353
  %v375 = verf.f32.pop %v354
  %v376 = verf.f32.pop %v355
  %v377 = verf.f32.pop %v356
  %v378 = verf.f32.pop %v357
  %v379 = verf.f32.pop %v358
  %v380 = verf.f32.pop %v359
  %v381 = verf.f32.pop %v360
  %v382 = verf.f32.pop %v361
  %v383 = vadd.f32 %v362, 1.0
  %v384 = vadd.f32 %v363, 1.0
  %v385 = vadd.f32 %v364, 1.0
  %v386 = vadd.f32 %v365, 1.0
  %v387 = vadd.f32 %v366, 1.0
  %v388 = vadd.f32 %v367, 1.0
  %v389 = vadd.f32 %v368, 1.0
  %v390 = vadd.f32 %v369, 1.0
  %v391 = vadd.f32 %v370, 1.0
  %v392 = vadd.f32 %v371, 1.0
  %v393 = vadd.f32 %v372, 1.0
  %v394 = vadd.f32 %v373, 1.0
  %v395 = vadd.f32 %v374, 1.0
  %v396 = vadd.f32 %v375, 1.0
  %v397 = vadd.f32 %v376, 1.0
  %v398 = vadd.f32 %v377, 1.0
  %v399 = vadd.f32 %v378, 1.0
  %v400 = vadd.f32 %v379, 1.0
  %v401 = vadd.f32 %v380, 1.0
  %v402 = vadd.f32 %v381, 1.0
  %v403 = vadd.f32 %v382, 1.0
  %v404 = vmul.f32 %v320, %v383
  %v405 = vmul.f32 %v321, %v384
  %v406 = vmul.f32 %v322, %v385
  %v407 = vmul.f32 %v323, %v386
  %v408 = vmul.f32 %v324, %v387
  %v409 = vmul.f32 %v325, %v388
  %v410 = vmul.f32 %v326, %v389
  %v411 = vmul.f32 %v327, %v390
  %v412 = vmul.f32 %v328, %v391
  %v413 = vmul.f32 %v329, %v392
  %v414 = vmul.f32 %v330, %v393
  %v415 = vmul.f32 %v331, %v394
  %v416 = vmul.f32 %v332, %v395
  %v417 = vmul.f32 %v333, %v396
  %v418 = vmul.f32 %v334, %v397
  %v419 = vmul.f32 %v335, %v398
  %v420 = vmul.f32 %v336, %v399
  %v421 = vmul.f32 %v337, %v400
  %v422 = vmul.f32 %v338, %v401
  %v423 = vmul.f32 %v339, %v402
  %v424 = vmul.f32 %v340, %v403
  %v425 = vld [vmem:[%s3] sm:$0xff]
  %v426 = vld [vmem:[%s3 + $0x8] sm:$0xff]
  %v427 = vld [vmem:[%s3 + $0x10] sm:$0xff]
  %v428 = vld [vmem:[%s3 + $0x18] sm:$0xff]
  %v429 = vld [vmem:[%s3 + $0x20] sm:$0x7f]
  %v430 = vld [vmem:[%s4] sm:$0xff]
  %v431 = vld [vmem:[%s4 + $0x8] sm:$0xff]
  %v432 = vld [vmem:[%s4 + $0x10] sm:$0xff]
  %v433 = vld [vmem:[%s4 + $0x18] sm:$0xff]
  %v434 = vld [vmem:[%s4 + $0x20] sm:$0xff]
  %v435 = vld [vmem:[%s4 + $0x28] sm:$0xff]
  %v436 = vld [vmem:[%s4 + $0x30] sm:$0xff]
  %v437 = vld [vmem:[%s4 + $0x38] sm:$0xff]
  %v438 = vld [vmem:[%s4 + $0x40] sm:$0xff]
  %v439 = vld [vmem:[%s4 + $0x48] sm:$0xff]
  %v440 = vld [vmem:[%s4 + $0x50] sm:$0xff]
  %v441 = vld [vmem:[%s4 + $0x58] sm:$0xff]
  %v442 = vld [vmem:[%s4 + $0x60] sm:$0x7f]
  %v443 = vld [vmem:[%s4 + $0x68] sm:$0x7f]
  %v444 = vld [vmem:[%s4 + $0x70] sm:$0x7f]
  %vm445 = vcmask 441344
  %v447 = vsel %vm445, %v425, 0
  %v450 = vsel %vm445, %v426, 0
  %v453 = vsel %vm445, %v427, 0
  %v456 = vsel %vm445, %v428, 0
  %v459 = vsel %vm445, %v429, 0
  %vm461 = vcmask 1045504
  %v463 = vsel %vm461, %v422, 0
  %v466 = vsel %vm461, %v423, 0
  %v469 = vsel %vm461, %v424, 0
  %471 = vmatprep.subr.mxu0 0.0
  %472 = vmatpush1.msra.mxu0 0.0
  %473 = vmatprep.subr.mxu0 0.0
  %474 = vmatpush1.msra.mxu0 0.0
  %475 = vmatprep.subr.mxu0 0.0
  %476 = vmatpush1.msra.mxu0 0.0
  %477 = vmatprep.subr.mxu0 0.0
  %478 = vmatpush1.msra.mxu0 0.0
  %479 = vmatprep.subr.mxu0 0.0
  %480 = vmatpush1.msra.mxu0 0.0
  %481 = vmatprep.subr.mxu0 0.0
  %482 = vmatpush1.msra.mxu0 0.0
  %483 = vmatprep.subr.mxu0 0.0
  %484 = vmatpush1.msra.mxu0 0.0
  %485 = vmatprep.subr.mxu0 0.0
  %486 = vmatpush1.msra.mxu0 0.0
  %487 = vmatprep.subr.mxu0 0.0
  %488 = vmatpush1.msra.mxu0 0.0
  %489 = vmatprep.subr.mxu0 %v466
  %490 = vmatpush1.msra.mxu0 %v463
  %491 = vmatprep.subr.mxu0 %v420
  %492 = vmatpush1.msra.mxu0 %v419
  %493 = vmatprep.subr.mxu0 %v417
  %494 = vmatpush1.msra.mxu0 %v416
  %495 = vmatprep.subr.mxu0 %v414
  %496 = vmatpush1.msra.mxu0 %v413
  %497 = vmatprep.subr.mxu0 %v411
  %498 = vmatpush1.msra.mxu0 %v410
  %499 = vmatprep.subr.mxu0 %v408
  %500 = vmatpush1.msra.mxu0 %v407
  %501 = vmatprep.subr.mxu0 %v405
  %502 = vmatpush1.msra.mxu0 %v404
  %503 = vmatprep.subr.mxu0 0.0
  %504 = vmatpush2.msra.mxu0 0.0
  %505 = vmatprep.subr.mxu0 0.0
  %506 = vmatpush2.msra.mxu0 0.0
  %507 = vmatprep.subr.mxu0 0.0
  %508 = vmatpush2.msra.mxu0 0.0
  %509 = vmatprep.subr.mxu0 0.0
  %510 = vmatpush2.msra.mxu0 0.0
  %511 = vmatprep.subr.mxu0 0.0
  %512 = vmatpush2.msra.mxu0 0.0
  %513 = vmatprep.subr.mxu0 0.0
  %514 = vmatpush2.msra.mxu0 0.0
  %515 = vmatprep.subr.mxu0 0.0
  %516 = vmatpush2.msra.mxu0 0.0
  %517 = vmatprep.subr.mxu0 0.0
  %518 = vmatpush2.msra.mxu0 0.0
  %519 = vmatprep.subr.mxu0 0.0
  %520 = vmatpush2.msra.mxu0 0.0
  %521 = vmatprep.subr.mxu0 0.0
  %522 = vmatpush2.msra.mxu0 0.0
  %523 = vmatprep.subr.mxu0 0.0
  %524 = vmatpush2.msra.mxu0 0.0
  %525 = vmatprep.subr.mxu0 0.0
  %526 = vmatpush2.msra.mxu0 0.0
  %527 = vmatprep.subr.mxu0 0.0
  %528 = vmatpush2.msra.mxu0 0.0
  %529 = vmatprep.subr.mxu0 0.0
  %530 = vmatpush2.msra.mxu0 0.0
  %531 = vmatprep.subr.mxu0 0.0
  %532 = vmatpush2.msra.mxu0 0.0
  %533 = vmatprep.subr.mxu0 0.0
  %534 = vmatpush2.msra.mxu0 0.0
  %535 = vmatprep.mubr.f32.mxu0 0.0
  %536 = vmatmul.mubr.f32.gmra.mxu0 %v447
  %v537 = vpop.f32.mrf.mxu0
  %v538 = vadd.f32 %v430, %v537
  %v539 = vpop.f32.mrf.mxu0
  %v540 = vadd.f32 %v431, %v539
  %541 = vmatprep.mubr.f32.mxu0 0.0
  %542 = vmatmul.mubr.f32.gmra.mxu0 %v450
  %v543 = vpop.f32.mrf.mxu0
  %v544 = vadd.f32 %v433, %v543
  %v545 = vpop.f32.mrf.mxu0
  %v546 = vadd.f32 %v434, %v545
  %547 = vmatprep.mubr.f32.mxu0 0.0
  %548 = vmatmul.mubr.f32.gmra.mxu0 %v453
  %v549 = vpop.f32.mrf.mxu0
  %v550 = vadd.f32 %v436, %v549
  %v551 = vpop.f32.mrf.mxu0
  %v552 = vadd.f32 %v437, %v551
  %553 = vmatprep.mubr.f32.mxu0 0.0
  %554 = vmatmul.mubr.f32.gmra.mxu0 %v456
  %v555 = vpop.f32.mrf.mxu0
  %v556 = vadd.f32 %v439, %v555
  %v557 = vpop.f32.mrf.mxu0
  %v558 = vadd.f32 %v440, %v557
  %559 = vmatprep.mubr.f32.mxu0 0.0
  %560 = vmatmul.mubr.f32.gmra.mxu0 %v459
  %v561 = vpop.f32.mrf.mxu0
  %v562 = vadd.f32 %v442, %v561
  %v563 = vpop.f32.mrf.mxu0
  %v564 = vadd.f32 %v443, %v563
  %565 = vdwg.mxu0
  %566 = vmatprep.subr.mxu0 0.0
  %567 = vmatpush1.msra.mxu0 0.0
  %568 = vmatprep.subr.mxu0 0.0
  %569 = vmatpush1.msra.mxu0 0.0
  %570 = vmatprep.subr.mxu0 0.0
  %571 = vmatpush1.msra.mxu0 0.0
  %572 = vmatprep.subr.mxu0 0.0
  %573 = vmatpush1.msra.mxu0 0.0
  %574 = vmatprep.subr.mxu0 0.0
  %575 = vmatpush1.msra.mxu0 0.0
  %576 = vmatprep.subr.mxu0 0.0
  %577 = vmatpush1.msra.mxu0 0.0
  %578 = vmatprep.subr.mxu0 0.0
  %579 = vmatpush1.msra.mxu0 0.0
  %580 = vmatprep.subr.mxu0 0.0
  %581 = vmatpush1.msra.mxu0 0.0
  %582 = vmatprep.subr.mxu0 0.0
  %583 = vmatpush1.msra.mxu0 0.0
  %584 = vmatprep.subr.mxu0 0.0
  %585 = vmatpush1.msra.mxu0 %v469
  %586 = vmatprep.subr.mxu0 0.0
  %587 = vmatpush1.msra.mxu0 %v421
  %588 = vmatprep.subr.mxu0 0.0
  %589 = vmatpush1.msra.mxu0 %v418
  %590 = vmatprep.subr.mxu0 0.0
  %591 = vmatpush1.msra.mxu0 %v415
  %592 = vmatprep.subr.mxu0 0.0
  %593 = vmatpush1.msra.mxu0 %v412
  %594 = vmatprep.subr.mxu0 0.0
  %595 = vmatpush1.msra.mxu0 %v409
  %596 = vmatprep.subr.mxu0 0.0
  %597 = vmatpush1.msra.mxu0 %v406
  %598 = vmatprep.subr.mxu0 0.0
  %599 = vmatpush2.msra.mxu0 0.0
  %600 = vmatprep.subr.mxu0 0.0
  %601 = vmatpush2.msra.mxu0 0.0
  %602 = vmatprep.subr.mxu0 0.0
  %603 = vmatpush2.msra.mxu0 0.0
  %604 = vmatprep.subr.mxu0 0.0
  %605 = vmatpush2.msra.mxu0 0.0
  %606 = vmatprep.subr.mxu0 0.0
  %607 = vmatpush2.msra.mxu0 0.0
  %608 = vmatprep.subr.mxu0 0.0
  %609 = vmatpush2.msra.mxu0 0.0
  %610 = vmatprep.subr.mxu0 0.0
  %611 = vmatpush2.msra.mxu0 0.0
  %612 = vmatprep.subr.mxu0 0.0
  %613 = vmatpush2.msra.mxu0 0.0
  %614 = vmatprep.subr.mxu0 0.0
  %615 = vmatpush2.msra.mxu0 0.0
  %616 = vmatprep.subr.mxu0 0.0
  %617 = vmatpush2.msra.mxu0 0.0
  %618 = vmatprep.subr.mxu0 0.0
  %619 = vmatpush2.msra.mxu0 0.0
  %620 = vmatprep.subr.mxu0 0.0
  %621 = vmatpush2.msra.mxu0 0.0
  %622 = vmatprep.subr.mxu0 0.0
  %623 = vmatpush2.msra.mxu0 0.0
  %624 = vmatprep.subr.mxu0 0.0
  %625 = vmatpush2.msra.mxu0 0.0
  %626 = vmatprep.subr.mxu0 0.0
  %627 = vmatpush2.msra.mxu0 0.0
  %628 = vmatprep.subr.mxu0 0.0
  %629 = vmatpush2.msra.mxu0 0.0
  %630 = vmatprep.mubr.f32.mxu0 0.0
  %631 = vmatmul.mubr.f32.gmra.mxu0 %v447
  %v632 = vpop.f32.mrf.mxu0
  %v633 = vadd.f32 %v432, %v632
  %v634 = vpop.f32.mrf.mxu0
  %635 = vmatprep.mubr.f32.mxu0 0.0
  %636 = vmatmul.mubr.f32.gmra.mxu0 %v450
  %v637 = vpop.f32.mrf.mxu0
  %v638 = vadd.f32 %v435, %v637
  %v639 = vpop.f32.mrf.mxu0
  %640 = vmatprep.mubr.f32.mxu0 0.0
  %641 = vmatmul.mubr.f32.gmra.mxu0 %v453
  %v642 = vpop.f32.mrf.mxu0
  %v643 = vadd.f32 %v438, %v642
  %v644 = vpop.f32.mrf.mxu0
  %645 = vmatprep.mubr.f32.mxu0 0.0
  %646 = vmatmul.mubr.f32.gmra.mxu0 %v456
  %v647 = vpop.f32.mrf.mxu0
  %v648 = vadd.f32 %v441, %v647
  %v649 = vpop.f32.mrf.mxu0
  %650 = vmatprep.mubr.f32.mxu0 0.0
  %651 = vmatmul.mubr.f32.gmra.mxu0 %v459
  %v652 = vpop.f32.mrf.mxu0
  %v653 = vadd.f32 %v444, %v652
  %v654 = vpop.f32.mrf.mxu0
  %655 = vdwg.mxu0
  %656 = vst [vmem:[%s5] sm:$0xff] %v538
  %657 = vst [vmem:[%s5 + $0x8] sm:$0xff] %v540
  %658 = vst [vmem:[%s5 + $0x10] sm:$0xff] %v633
  %659 = vst [vmem:[%s5 + $0x18] sm:$0xff] %v544
  %660 = vst [vmem:[%s5 + $0x20] sm:$0xff] %v546
  %661 = vst [vmem:[%s5 + $0x28] sm:$0xff] %v638
  %662 = vst [vmem:[%s5 + $0x30] sm:$0xff] %v550
  %663 = vst [vmem:[%s5 + $0x38] sm:$0xff] %v552
  %664 = vst [vmem:[%s5 + $0x40] sm:$0xff] %v643
  %665 = vst [vmem:[%s5 + $0x48] sm:$0xff] %v556
  %666 = vst [vmem:[%s5 + $0x50] sm:$0xff] %v558
  %667 = vst [vmem:[%s5 + $0x58] sm:$0xff] %v648
  %668 = vst [vmem:[%s5 + $0x60] sm:$0x7f] %v562
  %669 = vst [vmem:[%s5 + $0x68] sm:$0x7f] %v564
  %670 = vst [vmem:[%s5 + $0x70] sm:$0x7f] %v653
  // Predicated region
  $region22: #{model_forward_impl.1} parent=0 // pred_check
    _
  $region23: #{model_forward_impl.1} parent=0 // pred_check_branch
    %672 = sbr.rel (0) target = $region25
  $region24: #{model_forward_impl.1} parent=0 // pred_region
    _
  $region25: #{model_forward_impl.1} parent=0 // pred_fallthru
    _
  // Predicated region
  $region26: #{model_forward_impl.1} parent=0 // pred_check
    _
  $region27: #{model_forward_impl.1} parent=0 // pred_check_branch
    %674 = sbr.rel (0) target = $region29
  $region28: #{model_forward_impl.1} parent=0 // pred_region
    _
  $region29: #{model_forward_impl.1} parent=0 // pred_fallthru
    _

</llo_original>
